<compile_context>
chip_gen: v6e
topology: v6e:2x2x1
jax: 0.10.0
libtpu: 0.0.40
codegen_flags: <defaults>
</compile_context>

<pallas_src>
import jax
import jax.numpy as jnp
import numpy as np
from jax.experimental import pallas as pl
from jax.experimental.pallas import tpu as pltpu


# ---------------------------------------------------------------------------
# Packed-parameter layout inside one (8, 32) f32 SMEM slab:
#   W1 (8,4)  -> rows 0:8, cols 0:4      b1 (8,) -> rows 0:8, col 4
#   W2 (4,8)  -> rows 0:4, cols 8:16     b2 (4,) -> rows 0:4, col 16
#   W3 (3,4)  -> rows 0:3, cols 24:28    b3 (3,) -> rows 0:3, col 28
# Weights are stored in PyTorch (out, in) orientation.
# ---------------------------------------------------------------------------

def _round_up(n, m):
    return ((n + m - 1) // m) * m


def _ffnn_kernel(params_ref, x_ref, o_ref):
    # params_ref: (8, 32)      f32 in SMEM  (packed weights + biases)
    # x_ref:      (4, TR, C)   f32 in VMEM  (feature-major; batch on sublanes+lanes)
    # o_ref:      (3, TR, C)   f32 in VMEM
    x = [x_ref[k] for k in range(4)]                  # 4 x (TR, C) planes

    # ---- Linear(4 -> 8) + ReLU  (unrolled scalar*plane FMAs on the VPU) ----
    h1 = []
    for j in range(8):
        acc = x[0] * params_ref[j, 0]
        for k in range(1, 4):
            acc = acc + x[k] * params_ref[j, k]
        h1.append(jnp.maximum(acc + params_ref[j, 4], 0.0))

    # ---- Linear(8 -> 4) + ReLU ----
    h2 = []
    for j in range(4):
        acc = h1[0] * params_ref[j, 8]
        for k in range(1, 8):
            acc = acc + h1[k] * params_ref[j, 8 + k]
        h2.append(jnp.maximum(acc + params_ref[j, 16], 0.0))

    # ---- Linear(4 -> 3) logits ----
    z = []
    for j in range(3):
        acc = h2[0] * params_ref[j, 24]
        for k in range(1, 4):
            acc = acc + h2[k] * params_ref[j, 24 + k]
        z.append(acc + params_ref[j, 28])

    # ---- Softmax over the 3 class planes (PyTorch dim=1), all elementwise ----
    m = jnp.maximum(jnp.maximum(z[0], z[1]), z[2])
    e = [jnp.exp(zj - m) for zj in z]                 # EUP
    denom = e[0] + e[1] + e[2]
    inv = pl.reciprocal(denom, approx=True)           # EUP slot (otherwise idle)
    inv = inv * (2.0 - denom * inv)                   # 1 Newton step -> ~f32 exact
    for j in range(3):
        o_ref[j] = e[j] * inv


def pack_params(params):
    """Pack (w1,b1,w2,b2,w3,b3) [PyTorch (out,in) weights] into one (8,32) slab."""
    w1, b1, w2, b2, w3, b3 = params
    p = jnp.zeros((8, 32), jnp.float32)
    p = p.at[0:8, 0:4].set(w1.astype(jnp.float32))
    p = p.at[0:8, 4].set(b1.astype(jnp.float32))
    p = p.at[0:4, 8:16].set(w2.astype(jnp.float32))
    p = p.at[0:4, 16].set(b2.astype(jnp.float32))
    p = p.at[0:3, 24:28].set(w3.astype(jnp.float32))
    p = p.at[0:3, 28].set(b3.astype(jnp.float32))
    return p


def feedforward(x, packed_params, *, tile_rows=512, lane_cols=128):
    """x: (B, 4) float array -> (B, 3) softmax probabilities (matches the nn.Module)."""
    x = x.astype(jnp.float32)
    B = x.shape[0]
    C = lane_cols                                        # lane width (multiple of 128)

    rows_needed = -(-B // C)                             # ceil(B / C)
    tr = max(8, (int(tile_rows) // 8) * 8)               # sublane tile, multiple of 8
    tr = min(tr, _round_up(rows_needed, 8))
    R = _round_up(rows_needed, tr)                       # padded sublane extent
    Bp = R * C
    grid = R // tr

    # Wrapper-side layout plumbing: batch spread over (sublane, lane), feature leading.
    xp = jnp.pad(x, ((0, Bp - B), (0, 0)))               # (Bp, 4)
    xp = xp.reshape(R, C, 4).transpose(2, 0, 1)          # (4, R, C)

    out_t = pl.pallas_call(
        _ffnn_kernel,
        out_shape=jax.ShapeDtypeStruct((3, R, C), jnp.float32),
        grid_spec=pltpu.PrefetchScalarGridSpec(
            num_scalar_prefetch=0,
            grid=(grid,),
            in_specs=[
                pl.BlockSpec(memory_space=pltpu.MemorySpace.SMEM),   # packed params
                pl.BlockSpec((4, tr, C), lambda i: (0, i, 0)),       # x tile
            ],
            out_specs=pl.BlockSpec((3, tr, C), lambda i: (0, i, 0)),
        ),
        compiler_params=pltpu.CompilerParams(
            dimension_semantics=("parallel",)),          # shard grid steps across TCs (v7x)
        cost_estimate=pl.CostEstimate(
            flops=2 * Bp * (4 * 8 + 8 * 4 + 4 * 3),
            transcendentals=3 * Bp,
            bytes_accessed=Bp * (4 + 3) * 4 + 8 * 32 * 4,
        ),
    )(packed_params, xp)

    # Back to the PyTorch-facing (B, 3) layout; drop padded samples.
    return out_t.transpose(1, 2, 0).reshape(Bp, 3)[:B]


def init_params(key):
    """Deterministic init mimicking nn.Linear's uniform(-1/sqrt(fan_in), +1/sqrt(fan_in))."""
    def linear(key, fan_in, fan_out):
        kw, kb = jax.random.split(key)
        bound = float(fan_in) ** -0.5
        w = jax.random.uniform(kw, (fan_out, fan_in), jnp.float32, -bound, bound)
        b = jax.random.uniform(kb, (fan_out,), jnp.float32, -bound, bound)
        return w, b

    k1, k2, k3 = jax.random.split(key, 3)
    w1, b1 = linear(k1, 4, 8)
    w2, b2 = linear(k2, 8, 4)
    w3, b3 = linear(k3, 4, 3)
    return (w1, b1, w2, b2, w3, b3)


if __name__ == "__main__":
    key = jax.random.PRNGKey(0)
    kx, kp = jax.random.split(key)

    # Non-multiple of the 128*8 tile granularity -> exercises tail padding,
    # small tile_rows -> multi-step (pipelined) grid even at this small size.
    batch = 4100
    x = jax.random.normal(kx, (batch, 4), dtype=jnp.float32)
    params = init_params(kp)
    packed = pack_params(params)

    out = feedforward(x, packed, tile_rows=8)
    out = jax.block_until_ready(out)

    # Pure numpy f32 reference (avoids TPU bf16 default-matmul precision in the check).
    w1, b1, w2, b2, w3, b3 = [np.asarray(p, dtype=np.float32) for p in params]
    xn = np.asarray(x, dtype=np.float32)
    h1 = np.maximum(xn @ w1.T + b1, 0.0)
    h2 = np.maximum(h1 @ w2.T + b2, 0.0)
    logits = h2 @ w3.T + b3
    ez = np.exp(logits - logits.max(axis=1, keepdims=True))
    ref = ez / ez.sum(axis=1, keepdims=True)

    out_np = np.asarray(out)
    assert out_np.shape == (batch, 3)
    assert np.allclose(out_np, ref, atol=1e-4, rtol=1e-4), float(np.abs(out_np - ref).max())
    assert np.allclose(out_np.sum(axis=1), 1.0, atol=1e-4)

    # TODO(synk): torch autograd bookkeeping (requires_grad_) has no kernel equivalent;
    # this is the inference-only forward pass.
    print("KERNEL_OK")
</pallas_src>

<mosaic_0001>
module attributes {stable_mosaic.version = 11 : i64} {
  func.func @_ffnn_kernel(%arg0: i32, %arg1: memref<8x32xf32, #tpu.memory_space<smem>>, %arg2: memref<4x8x128xf32, #tpu.memory_space<vmem>>, %arg3: memref<3x8x128xf32, #tpu.memory_space<vmem>>) attributes {dimension_semantics = [#tpu.dimension_semantics<parallel>], iteration_bounds = array<i64: 5>, scalar_prefetch = 0 : i64, scratch_operands = 0 : i64, tpu.core_type = #tpu.core_type<tc>, window_params = [{transform_indices = @transform_0, window_bounds = array<i64: 8, 32>}, {transform_indices = @transform_1, window_bounds = array<i64: 4, 8, 128>}, {transform_indices = @transform_2, window_bounds = array<i64: 3, 8, 128>}]} {
    %c0 = arith.constant 0 : index
    %c0_0 = arith.constant 0 : index
    %c0_1 = arith.constant 0 : index
    %0 = vector.load %arg2[%c0, %c0_0, %c0_1] : memref<4x8x128xf32, #tpu.memory_space<vmem>>, vector<1x8x128xf32>
    %1 = vector.shape_cast %0 : vector<1x8x128xf32> to vector<8x128xf32>
    %c1 = arith.constant 1 : index
    %c0_2 = arith.constant 0 : index
    %c0_3 = arith.constant 0 : index
    %2 = vector.load %arg2[%c1, %c0_2, %c0_3] : memref<4x8x128xf32, #tpu.memory_space<vmem>>, vector<1x8x128xf32>
    %3 = vector.shape_cast %2 : vector<1x8x128xf32> to vector<8x128xf32>
    %c2 = arith.constant 2 : index
    %c0_4 = arith.constant 0 : index
    %c0_5 = arith.constant 0 : index
    %4 = vector.load %arg2[%c2, %c0_4, %c0_5] : memref<4x8x128xf32, #tpu.memory_space<vmem>>, vector<1x8x128xf32>
    %5 = vector.shape_cast %4 : vector<1x8x128xf32> to vector<8x128xf32>
    %c3 = arith.constant 3 : index
    %c0_6 = arith.constant 0 : index
    %c0_7 = arith.constant 0 : index
    %6 = vector.load %arg2[%c3, %c0_6, %c0_7] : memref<4x8x128xf32, #tpu.memory_space<vmem>>, vector<1x8x128xf32>
    %7 = vector.shape_cast %6 : vector<1x8x128xf32> to vector<8x128xf32>
    %c0_8 = arith.constant 0 : index
    %c0_9 = arith.constant 0 : index
    %8 = memref.load %arg1[%c0_8, %c0_9] : memref<8x32xf32, #tpu.memory_space<smem>>
    %9 = vector.broadcast %8 : f32 to vector<8x128xf32>
    %10 = arith.mulf %1, %9 : vector<8x128xf32>
    %c0_10 = arith.constant 0 : index
    %c1_11 = arith.constant 1 : index
    %11 = memref.load %arg1[%c0_10, %c1_11] : memref<8x32xf32, #tpu.memory_space<smem>>
    %12 = vector.broadcast %11 : f32 to vector<8x128xf32>
    %13 = arith.mulf %3, %12 : vector<8x128xf32>
    %14 = arith.addf %10, %13 : vector<8x128xf32>
    %c0_12 = arith.constant 0 : index
    %c2_13 = arith.constant 2 : index
    %15 = memref.load %arg1[%c0_12, %c2_13] : memref<8x32xf32, #tpu.memory_space<smem>>
    %16 = vector.broadcast %15 : f32 to vector<8x128xf32>
    %17 = arith.mulf %5, %16 : vector<8x128xf32>
    %18 = arith.addf %14, %17 : vector<8x128xf32>
    %c0_14 = arith.constant 0 : index
    %c3_15 = arith.constant 3 : index
    %19 = memref.load %arg1[%c0_14, %c3_15] : memref<8x32xf32, #tpu.memory_space<smem>>
    %20 = vector.broadcast %19 : f32 to vector<8x128xf32>
    %21 = arith.mulf %7, %20 : vector<8x128xf32>
    %22 = arith.addf %18, %21 : vector<8x128xf32>
    %c0_16 = arith.constant 0 : index
    %c4 = arith.constant 4 : index
    %23 = memref.load %arg1[%c0_16, %c4] : memref<8x32xf32, #tpu.memory_space<smem>>
    %24 = vector.broadcast %23 : f32 to vector<8x128xf32>
    %25 = arith.addf %22, %24 : vector<8x128xf32>
    %cst = arith.constant 0.000000e+00 : f32
    %26 = vector.broadcast %cst : f32 to vector<8x128xf32>
    %27 = arith.maximumf %25, %26 : vector<8x128xf32>
    %c1_17 = arith.constant 1 : index
    %c0_18 = arith.constant 0 : index
    %28 = memref.load %arg1[%c1_17, %c0_18] : memref<8x32xf32, #tpu.memory_space<smem>>
    %29 = vector.broadcast %28 : f32 to vector<8x128xf32>
    %30 = arith.mulf %1, %29 : vector<8x128xf32>
    %c1_19 = arith.constant 1 : index
    %c1_20 = arith.constant 1 : index
    %31 = memref.load %arg1[%c1_19, %c1_20] : memref<8x32xf32, #tpu.memory_space<smem>>
    %32 = vector.broadcast %31 : f32 to vector<8x128xf32>
    %33 = arith.mulf %3, %32 : vector<8x128xf32>
    %34 = arith.addf %30, %33 : vector<8x128xf32>
    %c1_21 = arith.constant 1 : index
    %c2_22 = arith.constant 2 : index
    %35 = memref.load %arg1[%c1_21, %c2_22] : memref<8x32xf32, #tpu.memory_space<smem>>
    %36 = vector.broadcast %35 : f32 to vector<8x128xf32>
    %37 = arith.mulf %5, %36 : vector<8x128xf32>
    %38 = arith.addf %34, %37 : vector<8x128xf32>
    %c1_23 = arith.constant 1 : index
    %c3_24 = arith.constant 3 : index
    %39 = memref.load %arg1[%c1_23, %c3_24] : memref<8x32xf32, #tpu.memory_space<smem>>
    %40 = vector.broadcast %39 : f32 to vector<8x128xf32>
    %41 = arith.mulf %7, %40 : vector<8x128xf32>
    %42 = arith.addf %38, %41 : vector<8x128xf32>
    %c1_25 = arith.constant 1 : index
    %c4_26 = arith.constant 4 : index
    %43 = memref.load %arg1[%c1_25, %c4_26] : memref<8x32xf32, #tpu.memory_space<smem>>
    %44 = vector.broadcast %43 : f32 to vector<8x128xf32>
    %45 = arith.addf %42, %44 : vector<8x128xf32>
    %cst_27 = arith.constant 0.000000e+00 : f32
    %46 = vector.broadcast %cst_27 : f32 to vector<8x128xf32>
    %47 = arith.maximumf %45, %46 : vector<8x128xf32>
    %c2_28 = arith.constant 2 : index
    %c0_29 = arith.constant 0 : index
    %48 = memref.load %arg1[%c2_28, %c0_29] : memref<8x32xf32, #tpu.memory_space<smem>>
    %49 = vector.broadcast %48 : f32 to vector<8x128xf32>
    %50 = arith.mulf %1, %49 : vector<8x128xf32>
    %c2_30 = arith.constant 2 : index
    %c1_31 = arith.constant 1 : index
    %51 = memref.load %arg1[%c2_30, %c1_31] : memref<8x32xf32, #tpu.memory_space<smem>>
    %52 = vector.broadcast %51 : f32 to vector<8x128xf32>
    %53 = arith.mulf %3, %52 : vector<8x128xf32>
    %54 = arith.addf %50, %53 : vector<8x128xf32>
    %c2_32 = arith.constant 2 : index
    %c2_33 = arith.constant 2 : index
    %55 = memref.load %arg1[%c2_32, %c2_33] : memref<8x32xf32, #tpu.memory_space<smem>>
    %56 = vector.broadcast %55 : f32 to vector<8x128xf32>
    %57 = arith.mulf %5, %56 : vector<8x128xf32>
    %58 = arith.addf %54, %57 : vector<8x128xf32>
    %c2_34 = arith.constant 2 : index
    %c3_35 = arith.constant 3 : index
    %59 = memref.load %arg1[%c2_34, %c3_35] : memref<8x32xf32, #tpu.memory_space<smem>>
    %60 = vector.broadcast %59 : f32 to vector<8x128xf32>
    %61 = arith.mulf %7, %60 : vector<8x128xf32>
    %62 = arith.addf %58, %61 : vector<8x128xf32>
    %c2_36 = arith.constant 2 : index
    %c4_37 = arith.constant 4 : index
    %63 = memref.load %arg1[%c2_36, %c4_37] : memref<8x32xf32, #tpu.memory_space<smem>>
    %64 = vector.broadcast %63 : f32 to vector<8x128xf32>
    %65 = arith.addf %62, %64 : vector<8x128xf32>
    %cst_38 = arith.constant 0.000000e+00 : f32
    %66 = vector.broadcast %cst_38 : f32 to vector<8x128xf32>
    %67 = arith.maximumf %65, %66 : vector<8x128xf32>
    %c3_39 = arith.constant 3 : index
    %c0_40 = arith.constant 0 : index
    %68 = memref.load %arg1[%c3_39, %c0_40] : memref<8x32xf32, #tpu.memory_space<smem>>
    %69 = vector.broadcast %68 : f32 to vector<8x128xf32>
    %70 = arith.mulf %1, %69 : vector<8x128xf32>
    %c3_41 = arith.constant 3 : index
    %c1_42 = arith.constant 1 : index
    %71 = memref.load %arg1[%c3_41, %c1_42] : memref<8x32xf32, #tpu.memory_space<smem>>
    %72 = vector.broadcast %71 : f32 to vector<8x128xf32>
    %73 = arith.mulf %3, %72 : vector<8x128xf32>
    %74 = arith.addf %70, %73 : vector<8x128xf32>
    %c3_43 = arith.constant 3 : index
    %c2_44 = arith.constant 2 : index
    %75 = memref.load %arg1[%c3_43, %c2_44] : memref<8x32xf32, #tpu.memory_space<smem>>
    %76 = vector.broadcast %75 : f32 to vector<8x128xf32>
    %77 = arith.mulf %5, %76 : vector<8x128xf32>
    %78 = arith.addf %74, %77 : vector<8x128xf32>
    %c3_45 = arith.constant 3 : index
    %c3_46 = arith.constant 3 : index
    %79 = memref.load %arg1[%c3_45, %c3_46] : memref<8x32xf32, #tpu.memory_space<smem>>
    %80 = vector.broadcast %79 : f32 to vector<8x128xf32>
    %81 = arith.mulf %7, %80 : vector<8x128xf32>
    %82 = arith.addf %78, %81 : vector<8x128xf32>
    %c3_47 = arith.constant 3 : index
    %c4_48 = arith.constant 4 : index
    %83 = memref.load %arg1[%c3_47, %c4_48] : memref<8x32xf32, #tpu.memory_space<smem>>
    %84 = vector.broadcast %83 : f32 to vector<8x128xf32>
    %85 = arith.addf %82, %84 : vector<8x128xf32>
    %cst_49 = arith.constant 0.000000e+00 : f32
    %86 = vector.broadcast %cst_49 : f32 to vector<8x128xf32>
    %87 = arith.maximumf %85, %86 : vector<8x128xf32>
    %c4_50 = arith.constant 4 : index
    %c0_51 = arith.constant 0 : index
    %88 = memref.load %arg1[%c4_50, %c0_51] : memref<8x32xf32, #tpu.memory_space<smem>>
    %89 = vector.broadcast %88 : f32 to vector<8x128xf32>
    %90 = arith.mulf %1, %89 : vector<8x128xf32>
    %c4_52 = arith.constant 4 : index
    %c1_53 = arith.constant 1 : index
    %91 = memref.load %arg1[%c4_52, %c1_53] : memref<8x32xf32, #tpu.memory_space<smem>>
    %92 = vector.broadcast %91 : f32 to vector<8x128xf32>
    %93 = arith.mulf %3, %92 : vector<8x128xf32>
    %94 = arith.addf %90, %93 : vector<8x128xf32>
    %c4_54 = arith.constant 4 : index
    %c2_55 = arith.constant 2 : index
    %95 = memref.load %arg1[%c4_54, %c2_55] : memref<8x32xf32, #tpu.memory_space<smem>>
    %96 = vector.broadcast %95 : f32 to vector<8x128xf32>
    %97 = arith.mulf %5, %96 : vector<8x128xf32>
    %98 = arith.addf %94, %97 : vector<8x128xf32>
    %c4_56 = arith.constant 4 : index
    %c3_57 = arith.constant 3 : index
    %99 = memref.load %arg1[%c4_56, %c3_57] : memref<8x32xf32, #tpu.memory_space<smem>>
    %100 = vector.broadcast %99 : f32 to vector<8x128xf32>
    %101 = arith.mulf %7, %100 : vector<8x128xf32>
    %102 = arith.addf %98, %101 : vector<8x128xf32>
    %c4_58 = arith.constant 4 : index
    %c4_59 = arith.constant 4 : index
    %103 = memref.load %arg1[%c4_58, %c4_59] : memref<8x32xf32, #tpu.memory_space<smem>>
    %104 = vector.broadcast %103 : f32 to vector<8x128xf32>
    %105 = arith.addf %102, %104 : vector<8x128xf32>
    %cst_60 = arith.constant 0.000000e+00 : f32
    %106 = vector.broadcast %cst_60 : f32 to vector<8x128xf32>
    %107 = arith.maximumf %105, %106 : vector<8x128xf32>
    %c5 = arith.constant 5 : index
    %c0_61 = arith.constant 0 : index
    %108 = memref.load %arg1[%c5, %c0_61] : memref<8x32xf32, #tpu.memory_space<smem>>
    %109 = vector.broadcast %108 : f32 to vector<8x128xf32>
    %110 = arith.mulf %1, %109 : vector<8x128xf32>
    %c5_62 = arith.constant 5 : index
    %c1_63 = arith.constant 1 : index
    %111 = memref.load %arg1[%c5_62, %c1_63] : memref<8x32xf32, #tpu.memory_space<smem>>
    %112 = vector.broadcast %111 : f32 to vector<8x128xf32>
    %113 = arith.mulf %3, %112 : vector<8x128xf32>
    %114 = arith.addf %110, %113 : vector<8x128xf32>
    %c5_64 = arith.constant 5 : index
    %c2_65 = arith.constant 2 : index
    %115 = memref.load %arg1[%c5_64, %c2_65] : memref<8x32xf32, #tpu.memory_space<smem>>
    %116 = vector.broadcast %115 : f32 to vector<8x128xf32>
    %117 = arith.mulf %5, %116 : vector<8x128xf32>
    %118 = arith.addf %114, %117 : vector<8x128xf32>
    %c5_66 = arith.constant 5 : index
    %c3_67 = arith.constant 3 : index
    %119 = memref.load %arg1[%c5_66, %c3_67] : memref<8x32xf32, #tpu.memory_space<smem>>
    %120 = vector.broadcast %119 : f32 to vector<8x128xf32>
    %121 = arith.mulf %7, %120 : vector<8x128xf32>
    %122 = arith.addf %118, %121 : vector<8x128xf32>
    %c5_68 = arith.constant 5 : index
    %c4_69 = arith.constant 4 : index
    %123 = memref.load %arg1[%c5_68, %c4_69] : memref<8x32xf32, #tpu.memory_space<smem>>
    %124 = vector.broadcast %123 : f32 to vector<8x128xf32>
    %125 = arith.addf %122, %124 : vector<8x128xf32>
    %cst_70 = arith.constant 0.000000e+00 : f32
    %126 = vector.broadcast %cst_70 : f32 to vector<8x128xf32>
    %127 = arith.maximumf %125, %126 : vector<8x128xf32>
    %c6 = arith.constant 6 : index
    %c0_71 = arith.constant 0 : index
    %128 = memref.load %arg1[%c6, %c0_71] : memref<8x32xf32, #tpu.memory_space<smem>>
    %129 = vector.broadcast %128 : f32 to vector<8x128xf32>
    %130 = arith.mulf %1, %129 : vector<8x128xf32>
    %c6_72 = arith.constant 6 : index
    %c1_73 = arith.constant 1 : index
    %131 = memref.load %arg1[%c6_72, %c1_73] : memref<8x32xf32, #tpu.memory_space<smem>>
    %132 = vector.broadcast %131 : f32 to vector<8x128xf32>
    %133 = arith.mulf %3, %132 : vector<8x128xf32>
    %134 = arith.addf %130, %133 : vector<8x128xf32>
    %c6_74 = arith.constant 6 : index
    %c2_75 = arith.constant 2 : index
    %135 = memref.load %arg1[%c6_74, %c2_75] : memref<8x32xf32, #tpu.memory_space<smem>>
    %136 = vector.broadcast %135 : f32 to vector<8x128xf32>
    %137 = arith.mulf %5, %136 : vector<8x128xf32>
    %138 = arith.addf %134, %137 : vector<8x128xf32>
    %c6_76 = arith.constant 6 : index
    %c3_77 = arith.constant 3 : index
    %139 = memref.load %arg1[%c6_76, %c3_77] : memref<8x32xf32, #tpu.memory_space<smem>>
    %140 = vector.broadcast %139 : f32 to vector<8x128xf32>
    %141 = arith.mulf %7, %140 : vector<8x128xf32>
    %142 = arith.addf %138, %141 : vector<8x128xf32>
    %c6_78 = arith.constant 6 : index
    %c4_79 = arith.constant 4 : index
    %143 = memref.load %arg1[%c6_78, %c4_79] : memref<8x32xf32, #tpu.memory_space<smem>>
    %144 = vector.broadcast %143 : f32 to vector<8x128xf32>
    %145 = arith.addf %142, %144 : vector<8x128xf32>
    %cst_80 = arith.constant 0.000000e+00 : f32
    %146 = vector.broadcast %cst_80 : f32 to vector<8x128xf32>
    %147 = arith.maximumf %145, %146 : vector<8x128xf32>
    %c7 = arith.constant 7 : index
    %c0_81 = arith.constant 0 : index
    %148 = memref.load %arg1[%c7, %c0_81] : memref<8x32xf32, #tpu.memory_space<smem>>
    %149 = vector.broadcast %148 : f32 to vector<8x128xf32>
    %150 = arith.mulf %1, %149 : vector<8x128xf32>
    %c7_82 = arith.constant 7 : index
    %c1_83 = arith.constant 1 : index
    %151 = memref.load %arg1[%c7_82, %c1_83] : memref<8x32xf32, #tpu.memory_space<smem>>
    %152 = vector.broadcast %151 : f32 to vector<8x128xf32>
    %153 = arith.mulf %3, %152 : vector<8x128xf32>
    %154 = arith.addf %150, %153 : vector<8x128xf32>
    %c7_84 = arith.constant 7 : index
    %c2_85 = arith.constant 2 : index
    %155 = memref.load %arg1[%c7_84, %c2_85] : memref<8x32xf32, #tpu.memory_space<smem>>
    %156 = vector.broadcast %155 : f32 to vector<8x128xf32>
    %157 = arith.mulf %5, %156 : vector<8x128xf32>
    %158 = arith.addf %154, %157 : vector<8x128xf32>
    %c7_86 = arith.constant 7 : index
    %c3_87 = arith.constant 3 : index
    %159 = memref.load %arg1[%c7_86, %c3_87] : memref<8x32xf32, #tpu.memory_space<smem>>
    %160 = vector.broadcast %159 : f32 to vector<8x128xf32>
    %161 = arith.mulf %7, %160 : vector<8x128xf32>
    %162 = arith.addf %158, %161 : vector<8x128xf32>
    %c7_88 = arith.constant 7 : index
    %c4_89 = arith.constant 4 : index
    %163 = memref.load %arg1[%c7_88, %c4_89] : memref<8x32xf32, #tpu.memory_space<smem>>
    %164 = vector.broadcast %163 : f32 to vector<8x128xf32>
    %165 = arith.addf %162, %164 : vector<8x128xf32>
    %cst_90 = arith.constant 0.000000e+00 : f32
    %166 = vector.broadcast %cst_90 : f32 to vector<8x128xf32>
    %167 = arith.maximumf %165, %166 : vector<8x128xf32>
    %c0_91 = arith.constant 0 : index
    %c8 = arith.constant 8 : index
    %168 = memref.load %arg1[%c0_91, %c8] : memref<8x32xf32, #tpu.memory_space<smem>>
    %169 = vector.broadcast %168 : f32 to vector<8x128xf32>
    %170 = arith.mulf %27, %169 : vector<8x128xf32>
    %c0_92 = arith.constant 0 : index
    %c9 = arith.constant 9 : index
    %171 = memref.load %arg1[%c0_92, %c9] : memref<8x32xf32, #tpu.memory_space<smem>>
    %172 = vector.broadcast %171 : f32 to vector<8x128xf32>
    %173 = arith.mulf %47, %172 : vector<8x128xf32>
    %174 = arith.addf %170, %173 : vector<8x128xf32>
    %c0_93 = arith.constant 0 : index
    %c10 = arith.constant 10 : index
    %175 = memref.load %arg1[%c0_93, %c10] : memref<8x32xf32, #tpu.memory_space<smem>>
    %176 = vector.broadcast %175 : f32 to vector<8x128xf32>
    %177 = arith.mulf %67, %176 : vector<8x128xf32>
    %178 = arith.addf %174, %177 : vector<8x128xf32>
    %c0_94 = arith.constant 0 : index
    %c11 = arith.constant 11 : index
    %179 = memref.load %arg1[%c0_94, %c11] : memref<8x32xf32, #tpu.memory_space<smem>>
    %180 = vector.broadcast %179 : f32 to vector<8x128xf32>
    %181 = arith.mulf %87, %180 : vector<8x128xf32>
    %182 = arith.addf %178, %181 : vector<8x128xf32>
    %c0_95 = arith.constant 0 : index
    %c12 = arith.constant 12 : index
    %183 = memref.load %arg1[%c0_95, %c12] : memref<8x32xf32, #tpu.memory_space<smem>>
    %184 = vector.broadcast %183 : f32 to vector<8x128xf32>
    %185 = arith.mulf %107, %184 : vector<8x128xf32>
    %186 = arith.addf %182, %185 : vector<8x128xf32>
    %c0_96 = arith.constant 0 : index
    %c13 = arith.constant 13 : index
    %187 = memref.load %arg1[%c0_96, %c13] : memref<8x32xf32, #tpu.memory_space<smem>>
    %188 = vector.broadcast %187 : f32 to vector<8x128xf32>
    %189 = arith.mulf %127, %188 : vector<8x128xf32>
    %190 = arith.addf %186, %189 : vector<8x128xf32>
    %c0_97 = arith.constant 0 : index
    %c14 = arith.constant 14 : index
    %191 = memref.load %arg1[%c0_97, %c14] : memref<8x32xf32, #tpu.memory_space<smem>>
    %192 = vector.broadcast %191 : f32 to vector<8x128xf32>
    %193 = arith.mulf %147, %192 : vector<8x128xf32>
    %194 = arith.addf %190, %193 : vector<8x128xf32>
    %c0_98 = arith.constant 0 : index
    %c15 = arith.constant 15 : index
    %195 = memref.load %arg1[%c0_98, %c15] : memref<8x32xf32, #tpu.memory_space<smem>>
    %196 = vector.broadcast %195 : f32 to vector<8x128xf32>
    %197 = arith.mulf %167, %196 : vector<8x128xf32>
    %198 = arith.addf %194, %197 : vector<8x128xf32>
    %c0_99 = arith.constant 0 : index
    %c16 = arith.constant 16 : index
    %199 = memref.load %arg1[%c0_99, %c16] : memref<8x32xf32, #tpu.memory_space<smem>>
    %200 = vector.broadcast %199 : f32 to vector<8x128xf32>
    %201 = arith.addf %198, %200 : vector<8x128xf32>
    %cst_100 = arith.constant 0.000000e+00 : f32
    %202 = vector.broadcast %cst_100 : f32 to vector<8x128xf32>
    %203 = arith.maximumf %201, %202 : vector<8x128xf32>
    %c1_101 = arith.constant 1 : index
    %c8_102 = arith.constant 8 : index
    %204 = memref.load %arg1[%c1_101, %c8_102] : memref<8x32xf32, #tpu.memory_space<smem>>
    %205 = vector.broadcast %204 : f32 to vector<8x128xf32>
    %206 = arith.mulf %27, %205 : vector<8x128xf32>
    %c1_103 = arith.constant 1 : index
    %c9_104 = arith.constant 9 : index
    %207 = memref.load %arg1[%c1_103, %c9_104] : memref<8x32xf32, #tpu.memory_space<smem>>
    %208 = vector.broadcast %207 : f32 to vector<8x128xf32>
    %209 = arith.mulf %47, %208 : vector<8x128xf32>
    %210 = arith.addf %206, %209 : vector<8x128xf32>
    %c1_105 = arith.constant 1 : index
    %c10_106 = arith.constant 10 : index
    %211 = memref.load %arg1[%c1_105, %c10_106] : memref<8x32xf32, #tpu.memory_space<smem>>
    %212 = vector.broadcast %211 : f32 to vector<8x128xf32>
    %213 = arith.mulf %67, %212 : vector<8x128xf32>
    %214 = arith.addf %210, %213 : vector<8x128xf32>
    %c1_107 = arith.constant 1 : index
    %c11_108 = arith.constant 11 : index
    %215 = memref.load %arg1[%c1_107, %c11_108] : memref<8x32xf32, #tpu.memory_space<smem>>
    %216 = vector.broadcast %215 : f32 to vector<8x128xf32>
    %217 = arith.mulf %87, %216 : vector<8x128xf32>
    %218 = arith.addf %214, %217 : vector<8x128xf32>
    %c1_109 = arith.constant 1 : index
    %c12_110 = arith.constant 12 : index
    %219 = memref.load %arg1[%c1_109, %c12_110] : memref<8x32xf32, #tpu.memory_space<smem>>
    %220 = vector.broadcast %219 : f32 to vector<8x128xf32>
    %221 = arith.mulf %107, %220 : vector<8x128xf32>
    %222 = arith.addf %218, %221 : vector<8x128xf32>
    %c1_111 = arith.constant 1 : index
    %c13_112 = arith.constant 13 : index
    %223 = memref.load %arg1[%c1_111, %c13_112] : memref<8x32xf32, #tpu.memory_space<smem>>
    %224 = vector.broadcast %223 : f32 to vector<8x128xf32>
    %225 = arith.mulf %127, %224 : vector<8x128xf32>
    %226 = arith.addf %222, %225 : vector<8x128xf32>
    %c1_113 = arith.constant 1 : index
    %c14_114 = arith.constant 14 : index
    %227 = memref.load %arg1[%c1_113, %c14_114] : memref<8x32xf32, #tpu.memory_space<smem>>
    %228 = vector.broadcast %227 : f32 to vector<8x128xf32>
    %229 = arith.mulf %147, %228 : vector<8x128xf32>
    %230 = arith.addf %226, %229 : vector<8x128xf32>
    %c1_115 = arith.constant 1 : index
    %c15_116 = arith.constant 15 : index
    %231 = memref.load %arg1[%c1_115, %c15_116] : memref<8x32xf32, #tpu.memory_space<smem>>
    %232 = vector.broadcast %231 : f32 to vector<8x128xf32>
    %233 = arith.mulf %167, %232 : vector<8x128xf32>
    %234 = arith.addf %230, %233 : vector<8x128xf32>
    %c1_117 = arith.constant 1 : index
    %c16_118 = arith.constant 16 : index
    %235 = memref.load %arg1[%c1_117, %c16_118] : memref<8x32xf32, #tpu.memory_space<smem>>
    %236 = vector.broadcast %235 : f32 to vector<8x128xf32>
    %237 = arith.addf %234, %236 : vector<8x128xf32>
    %cst_119 = arith.constant 0.000000e+00 : f32
    %238 = vector.broadcast %cst_119 : f32 to vector<8x128xf32>
    %239 = arith.maximumf %237, %238 : vector<8x128xf32>
    %c2_120 = arith.constant 2 : index
    %c8_121 = arith.constant 8 : index
    %240 = memref.load %arg1[%c2_120, %c8_121] : memref<8x32xf32, #tpu.memory_space<smem>>
    %241 = vector.broadcast %240 : f32 to vector<8x128xf32>
    %242 = arith.mulf %27, %241 : vector<8x128xf32>
    %c2_122 = arith.constant 2 : index
    %c9_123 = arith.constant 9 : index
    %243 = memref.load %arg1[%c2_122, %c9_123] : memref<8x32xf32, #tpu.memory_space<smem>>
    %244 = vector.broadcast %243 : f32 to vector<8x128xf32>
    %245 = arith.mulf %47, %244 : vector<8x128xf32>
    %246 = arith.addf %242, %245 : vector<8x128xf32>
    %c2_124 = arith.constant 2 : index
    %c10_125 = arith.constant 10 : index
    %247 = memref.load %arg1[%c2_124, %c10_125] : memref<8x32xf32, #tpu.memory_space<smem>>
    %248 = vector.broadcast %247 : f32 to vector<8x128xf32>
    %249 = arith.mulf %67, %248 : vector<8x128xf32>
    %250 = arith.addf %246, %249 : vector<8x128xf32>
    %c2_126 = arith.constant 2 : index
    %c11_127 = arith.constant 11 : index
    %251 = memref.load %arg1[%c2_126, %c11_127] : memref<8x32xf32, #tpu.memory_space<smem>>
    %252 = vector.broadcast %251 : f32 to vector<8x128xf32>
    %253 = arith.mulf %87, %252 : vector<8x128xf32>
    %254 = arith.addf %250, %253 : vector<8x128xf32>
    %c2_128 = arith.constant 2 : index
    %c12_129 = arith.constant 12 : index
    %255 = memref.load %arg1[%c2_128, %c12_129] : memref<8x32xf32, #tpu.memory_space<smem>>
    %256 = vector.broadcast %255 : f32 to vector<8x128xf32>
    %257 = arith.mulf %107, %256 : vector<8x128xf32>
    %258 = arith.addf %254, %257 : vector<8x128xf32>
    %c2_130 = arith.constant 2 : index
    %c13_131 = arith.constant 13 : index
    %259 = memref.load %arg1[%c2_130, %c13_131] : memref<8x32xf32, #tpu.memory_space<smem>>
    %260 = vector.broadcast %259 : f32 to vector<8x128xf32>
    %261 = arith.mulf %127, %260 : vector<8x128xf32>
    %262 = arith.addf %258, %261 : vector<8x128xf32>
    %c2_132 = arith.constant 2 : index
    %c14_133 = arith.constant 14 : index
    %263 = memref.load %arg1[%c2_132, %c14_133] : memref<8x32xf32, #tpu.memory_space<smem>>
    %264 = vector.broadcast %263 : f32 to vector<8x128xf32>
    %265 = arith.mulf %147, %264 : vector<8x128xf32>
    %266 = arith.addf %262, %265 : vector<8x128xf32>
    %c2_134 = arith.constant 2 : index
    %c15_135 = arith.constant 15 : index
    %267 = memref.load %arg1[%c2_134, %c15_135] : memref<8x32xf32, #tpu.memory_space<smem>>
    %268 = vector.broadcast %267 : f32 to vector<8x128xf32>
    %269 = arith.mulf %167, %268 : vector<8x128xf32>
    %270 = arith.addf %266, %269 : vector<8x128xf32>
    %c2_136 = arith.constant 2 : index
    %c16_137 = arith.constant 16 : index
    %271 = memref.load %arg1[%c2_136, %c16_137] : memref<8x32xf32, #tpu.memory_space<smem>>
    %272 = vector.broadcast %271 : f32 to vector<8x128xf32>
    %273 = arith.addf %270, %272 : vector<8x128xf32>
    %cst_138 = arith.constant 0.000000e+00 : f32
    %274 = vector.broadcast %cst_138 : f32 to vector<8x128xf32>
    %275 = arith.maximumf %273, %274 : vector<8x128xf32>
    %c3_139 = arith.constant 3 : index
    %c8_140 = arith.constant 8 : index
    %276 = memref.load %arg1[%c3_139, %c8_140] : memref<8x32xf32, #tpu.memory_space<smem>>
    %277 = vector.broadcast %276 : f32 to vector<8x128xf32>
    %278 = arith.mulf %27, %277 : vector<8x128xf32>
    %c3_141 = arith.constant 3 : index
    %c9_142 = arith.constant 9 : index
    %279 = memref.load %arg1[%c3_141, %c9_142] : memref<8x32xf32, #tpu.memory_space<smem>>
    %280 = vector.broadcast %279 : f32 to vector<8x128xf32>
    %281 = arith.mulf %47, %280 : vector<8x128xf32>
    %282 = arith.addf %278, %281 : vector<8x128xf32>
    %c3_143 = arith.constant 3 : index
    %c10_144 = arith.constant 10 : index
    %283 = memref.load %arg1[%c3_143, %c10_144] : memref<8x32xf32, #tpu.memory_space<smem>>
    %284 = vector.broadcast %283 : f32 to vector<8x128xf32>
    %285 = arith.mulf %67, %284 : vector<8x128xf32>
    %286 = arith.addf %282, %285 : vector<8x128xf32>
    %c3_145 = arith.constant 3 : index
    %c11_146 = arith.constant 11 : index
    %287 = memref.load %arg1[%c3_145, %c11_146] : memref<8x32xf32, #tpu.memory_space<smem>>
    %288 = vector.broadcast %287 : f32 to vector<8x128xf32>
    %289 = arith.mulf %87, %288 : vector<8x128xf32>
    %290 = arith.addf %286, %289 : vector<8x128xf32>
    %c3_147 = arith.constant 3 : index
    %c12_148 = arith.constant 12 : index
    %291 = memref.load %arg1[%c3_147, %c12_148] : memref<8x32xf32, #tpu.memory_space<smem>>
    %292 = vector.broadcast %291 : f32 to vector<8x128xf32>
    %293 = arith.mulf %107, %292 : vector<8x128xf32>
    %294 = arith.addf %290, %293 : vector<8x128xf32>
    %c3_149 = arith.constant 3 : index
    %c13_150 = arith.constant 13 : index
    %295 = memref.load %arg1[%c3_149, %c13_150] : memref<8x32xf32, #tpu.memory_space<smem>>
    %296 = vector.broadcast %295 : f32 to vector<8x128xf32>
    %297 = arith.mulf %127, %296 : vector<8x128xf32>
    %298 = arith.addf %294, %297 : vector<8x128xf32>
    %c3_151 = arith.constant 3 : index
    %c14_152 = arith.constant 14 : index
    %299 = memref.load %arg1[%c3_151, %c14_152] : memref<8x32xf32, #tpu.memory_space<smem>>
    %300 = vector.broadcast %299 : f32 to vector<8x128xf32>
    %301 = arith.mulf %147, %300 : vector<8x128xf32>
    %302 = arith.addf %298, %301 : vector<8x128xf32>
    %c3_153 = arith.constant 3 : index
    %c15_154 = arith.constant 15 : index
    %303 = memref.load %arg1[%c3_153, %c15_154] : memref<8x32xf32, #tpu.memory_space<smem>>
    %304 = vector.broadcast %303 : f32 to vector<8x128xf32>
    %305 = arith.mulf %167, %304 : vector<8x128xf32>
    %306 = arith.addf %302, %305 : vector<8x128xf32>
    %c3_155 = arith.constant 3 : index
    %c16_156 = arith.constant 16 : index
    %307 = memref.load %arg1[%c3_155, %c16_156] : memref<8x32xf32, #tpu.memory_space<smem>>
    %308 = vector.broadcast %307 : f32 to vector<8x128xf32>
    %309 = arith.addf %306, %308 : vector<8x128xf32>
    %cst_157 = arith.constant 0.000000e+00 : f32
    %310 = vector.broadcast %cst_157 : f32 to vector<8x128xf32>
    %311 = arith.maximumf %309, %310 : vector<8x128xf32>
    %c0_158 = arith.constant 0 : index
    %c24 = arith.constant 24 : index
    %312 = memref.load %arg1[%c0_158, %c24] : memref<8x32xf32, #tpu.memory_space<smem>>
    %313 = vector.broadcast %312 : f32 to vector<8x128xf32>
    %314 = arith.mulf %203, %313 : vector<8x128xf32>
    %c0_159 = arith.constant 0 : index
    %c25 = arith.constant 25 : index
    %315 = memref.load %arg1[%c0_159, %c25] : memref<8x32xf32, #tpu.memory_space<smem>>
    %316 = vector.broadcast %315 : f32 to vector<8x128xf32>
    %317 = arith.mulf %239, %316 : vector<8x128xf32>
    %318 = arith.addf %314, %317 : vector<8x128xf32>
    %c0_160 = arith.constant 0 : index
    %c26 = arith.constant 26 : index
    %319 = memref.load %arg1[%c0_160, %c26] : memref<8x32xf32, #tpu.memory_space<smem>>
    %320 = vector.broadcast %319 : f32 to vector<8x128xf32>
    %321 = arith.mulf %275, %320 : vector<8x128xf32>
    %322 = arith.addf %318, %321 : vector<8x128xf32>
    %c0_161 = arith.constant 0 : index
    %c27 = arith.constant 27 : index
    %323 = memref.load %arg1[%c0_161, %c27] : memref<8x32xf32, #tpu.memory_space<smem>>
    %324 = vector.broadcast %323 : f32 to vector<8x128xf32>
    %325 = arith.mulf %311, %324 : vector<8x128xf32>
    %326 = arith.addf %322, %325 : vector<8x128xf32>
    %c0_162 = arith.constant 0 : index
    %c28 = arith.constant 28 : index
    %327 = memref.load %arg1[%c0_162, %c28] : memref<8x32xf32, #tpu.memory_space<smem>>
    %328 = vector.broadcast %327 : f32 to vector<8x128xf32>
    %329 = arith.addf %326, %328 : vector<8x128xf32>
    %c1_163 = arith.constant 1 : index
    %c24_164 = arith.constant 24 : index
    %330 = memref.load %arg1[%c1_163, %c24_164] : memref<8x32xf32, #tpu.memory_space<smem>>
    %331 = vector.broadcast %330 : f32 to vector<8x128xf32>
    %332 = arith.mulf %203, %331 : vector<8x128xf32>
    %c1_165 = arith.constant 1 : index
    %c25_166 = arith.constant 25 : index
    %333 = memref.load %arg1[%c1_165, %c25_166] : memref<8x32xf32, #tpu.memory_space<smem>>
    %334 = vector.broadcast %333 : f32 to vector<8x128xf32>
    %335 = arith.mulf %239, %334 : vector<8x128xf32>
    %336 = arith.addf %332, %335 : vector<8x128xf32>
    %c1_167 = arith.constant 1 : index
    %c26_168 = arith.constant 26 : index
    %337 = memref.load %arg1[%c1_167, %c26_168] : memref<8x32xf32, #tpu.memory_space<smem>>
    %338 = vector.broadcast %337 : f32 to vector<8x128xf32>
    %339 = arith.mulf %275, %338 : vector<8x128xf32>
    %340 = arith.addf %336, %339 : vector<8x128xf32>
    %c1_169 = arith.constant 1 : index
    %c27_170 = arith.constant 27 : index
    %341 = memref.load %arg1[%c1_169, %c27_170] : memref<8x32xf32, #tpu.memory_space<smem>>
    %342 = vector.broadcast %341 : f32 to vector<8x128xf32>
    %343 = arith.mulf %311, %342 : vector<8x128xf32>
    %344 = arith.addf %340, %343 : vector<8x128xf32>
    %c1_171 = arith.constant 1 : index
    %c28_172 = arith.constant 28 : index
    %345 = memref.load %arg1[%c1_171, %c28_172] : memref<8x32xf32, #tpu.memory_space<smem>>
    %346 = vector.broadcast %345 : f32 to vector<8x128xf32>
    %347 = arith.addf %344, %346 : vector<8x128xf32>
    %c2_173 = arith.constant 2 : index
    %c24_174 = arith.constant 24 : index
    %348 = memref.load %arg1[%c2_173, %c24_174] : memref<8x32xf32, #tpu.memory_space<smem>>
    %349 = vector.broadcast %348 : f32 to vector<8x128xf32>
    %350 = arith.mulf %203, %349 : vector<8x128xf32>
    %c2_175 = arith.constant 2 : index
    %c25_176 = arith.constant 25 : index
    %351 = memref.load %arg1[%c2_175, %c25_176] : memref<8x32xf32, #tpu.memory_space<smem>>
    %352 = vector.broadcast %351 : f32 to vector<8x128xf32>
    %353 = arith.mulf %239, %352 : vector<8x128xf32>
    %354 = arith.addf %350, %353 : vector<8x128xf32>
    %c2_177 = arith.constant 2 : index
    %c26_178 = arith.constant 26 : index
    %355 = memref.load %arg1[%c2_177, %c26_178] : memref<8x32xf32, #tpu.memory_space<smem>>
    %356 = vector.broadcast %355 : f32 to vector<8x128xf32>
    %357 = arith.mulf %275, %356 : vector<8x128xf32>
    %358 = arith.addf %354, %357 : vector<8x128xf32>
    %c2_179 = arith.constant 2 : index
    %c27_180 = arith.constant 27 : index
    %359 = memref.load %arg1[%c2_179, %c27_180] : memref<8x32xf32, #tpu.memory_space<smem>>
    %360 = vector.broadcast %359 : f32 to vector<8x128xf32>
    %361 = arith.mulf %311, %360 : vector<8x128xf32>
    %362 = arith.addf %358, %361 : vector<8x128xf32>
    %c2_181 = arith.constant 2 : index
    %c28_182 = arith.constant 28 : index
    %363 = memref.load %arg1[%c2_181, %c28_182] : memref<8x32xf32, #tpu.memory_space<smem>>
    %364 = vector.broadcast %363 : f32 to vector<8x128xf32>
    %365 = arith.addf %362, %364 : vector<8x128xf32>
    %366 = arith.maximumf %329, %347 : vector<8x128xf32>
    %367 = arith.maximumf %366, %365 : vector<8x128xf32>
    %368 = arith.subf %329, %367 : vector<8x128xf32>
    %369 = math.exp %368 : vector<8x128xf32>
    %370 = arith.subf %347, %367 : vector<8x128xf32>
    %371 = math.exp %370 : vector<8x128xf32>
    %372 = arith.subf %365, %367 : vector<8x128xf32>
    %373 = math.exp %372 : vector<8x128xf32>
    %374 = arith.addf %369, %371 : vector<8x128xf32>
    %375 = arith.addf %374, %373 : vector<8x128xf32>
    %376 = tpu.reciprocal %375 {approx = true} : vector<8x128xf32> -> vector<8x128xf32>
    %377 = arith.mulf %375, %376 : vector<8x128xf32>
    %cst_183 = arith.constant 2.000000e+00 : f32
    %378 = vector.broadcast %cst_183 : f32 to vector<8x128xf32>
    %379 = arith.subf %378, %377 : vector<8x128xf32>
    %380 = arith.mulf %376, %379 : vector<8x128xf32>
    %381 = arith.mulf %369, %380 : vector<8x128xf32>
    %c0_184 = arith.constant 0 : index
    %c0_185 = arith.constant 0 : index
    %c0_186 = arith.constant 0 : index
    %382 = vector.load %arg3[%c0_184, %c0_185, %c0_186] : memref<3x8x128xf32, #tpu.memory_space<vmem>>, vector<1x8x128xf32>
    %383 = vector.shape_cast %382 : vector<1x8x128xf32> to vector<8x128xf32>
    %384 = vector.shape_cast %381 : vector<8x128xf32> to vector<1x8x128xf32>
    tpu.vector_store %arg3[%c0_184, %c0_185, %c0_186], %384 {strides = array<i32>} : memref<3x8x128xf32, #tpu.memory_space<vmem>>, vector<1x8x128xf32>,
    %385 = arith.mulf %371, %380 : vector<8x128xf32>
    %c1_187 = arith.constant 1 : index
    %c0_188 = arith.constant 0 : index
    %c0_189 = arith.constant 0 : index
    %386 = vector.load %arg3[%c1_187, %c0_188, %c0_189] : memref<3x8x128xf32, #tpu.memory_space<vmem>>, vector<1x8x128xf32>
    %387 = vector.shape_cast %386 : vector<1x8x128xf32> to vector<8x128xf32>
    %388 = vector.shape_cast %385 : vector<8x128xf32> to vector<1x8x128xf32>
    tpu.vector_store %arg3[%c1_187, %c0_188, %c0_189], %388 {strides = array<i32>} : memref<3x8x128xf32, #tpu.memory_space<vmem>>, vector<1x8x128xf32>,
    %389 = arith.mulf %373, %380 : vector<8x128xf32>
    %c2_190 = arith.constant 2 : index
    %c0_191 = arith.constant 0 : index
    %c0_192 = arith.constant 0 : index
    %390 = vector.load %arg3[%c2_190, %c0_191, %c0_192] : memref<3x8x128xf32, #tpu.memory_space<vmem>>, vector<1x8x128xf32>
    %391 = vector.shape_cast %390 : vector<1x8x128xf32> to vector<8x128xf32>
    %392 = vector.shape_cast %389 : vector<8x128xf32> to vector<1x8x128xf32>
    tpu.vector_store %arg3[%c2_190, %c0_191, %c0_192], %392 {strides = array<i32>} : memref<3x8x128xf32, #tpu.memory_space<vmem>>, vector<1x8x128xf32>,
    return
  }
  func.func @transform_0(%arg0: i32) -> (i32, i32) {
    %c0_i32 = arith.constant 0 : i32
    %c0_i32_0 = arith.constant 0 : i32
    %c0_i32_1 = arith.constant 0 : i32
    return %c0_i32, %c0_i32_0 : i32, i32
  }
  func.func @transform_1(%arg0: i32) -> (i32, i32, i32) {
    %c0_i32 = arith.constant 0 : i32
    %c0_i32_0 = arith.constant 0 : i32
    %c0_i32_1 = arith.constant 0 : i32
    return %c0_i32, %arg0, %c0_i32_0 : i32, i32, i32
  }
  func.func @transform_2(%arg0: i32) -> (i32, i32, i32) {
    %c0_i32 = arith.constant 0 : i32
    %c0_i32_0 = arith.constant 0 : i32
    %c0_i32_1 = arith.constant 0 : i32
    return %c0_i32, %arg0, %c0_i32_0 : i32, i32, i32
  }
}

</mosaic_0001>

<llo_original>
// kernel: tpu_custom_call.1
$region0: #{tpu_custom_call.1}
  #allocation0 [shape = 'u32[]', space=smem, size = 0x4, offset = 0x4, fixed_abs, tag = 'smem constant byte address 0x4 - core index']
  #allocation1 [shape = 'u32[144,128]{1,0:T(1,128)}', space=vmem, size = 0x12000, scoped, tag = 'internal scratch']
  %s0 = inlined_call_operand.hbm [shape: f32[8,32], index: 0, kind: input, shape index: {}]
  %s1 = inlined_call_operand.hbm [shape: f32[4,40,128], index: 1, kind: input, shape index: {}]
  %s2 = inlined_call_operand.hbm [shape: f32[3,40,128], index: 2, kind: output, shape index: {}]
  %s3 = sld [smem:[#allocation0]]
  $region49: #{tpu_custom_call.1} parent=0
    _
  %s5 = ssub.s32 1, %s3
  %s6 = scalar_select 0, %s5, %s3
  $region1: #{tpu_custom_call.1} parent=0
    #allocation2 [shape = 'u8[4096]{0}', space=smem, size = 0x1000, scoped, tag = 'input window, operand 0, single buffered']
    #allocation3 [shape = 's32[2]{0}', space=sflag, size = 0x8, scoped, tag = 'scoped memory for tpu_custom_call.1']
    #allocation4 [shape = 's32[2]{0}', space=sflag, size = 0x8, scoped, tag = 'scoped memory for tpu_custom_call.1']
    #allocation5 [shape = 's32[2]{0}', space=sflag, size = 0x8, scoped, tag = 'scoped memory for tpu_custom_call.1']
    #allocation6 [shape = 'u8[32768]{0}', space=vmem, size = 0x8000, scoped, tag = 'input window, operand 1']
    #allocation7 [shape = 'u8[24576]{0}', space=vmem, size = 0x6000, scoped, tag = 'output window, operand 0']
    %7 = vsyncpa [#allocation5], 0
    %8 = vsyncpa [#allocation3], 0
    %s9 = scalar_lea.sflag [#allocation3], 1
    %10 = vsyncpa %s9, 0
    %11 = vsyncpa [#allocation4], 0
    %s12 = scalar_lea.sflag [#allocation4], 1
    %13 = vsyncpa %s12, 0
    loop: start=0, step=1, limit=7
    $region2: #{tpu_custom_call.1} parent=1 // loop_pre_header
      _
    $region3: #{tpu_custom_call.1} parent=1 // loop_header
      %s15 = sphi 0, %s19
      %p16 = scmp.ge.s32.totalorder %s15, 7
      %s23 = sphi 0, %s23
      %s25 = sphi 0, %s23
      %s26 = sphi 0, %s25
      %s40 = sphi 0, %s26
      %s46 = sphi 0, %s48
      %s49 = sphi 0, %s46
      %s50 = sphi 0, %s49
      %s66 = sphi 0, %s50
      %s72 = sphi 0, %s74
      %s75 = sphi 0, %s72
      %s76 = sphi 0, %s75
      %s92 = sphi 0, %s76
    $region4: #{tpu_custom_call.1} parent=1 // loop_header_branch
      %18 = sbr.rel (%p16) target = $region8
    $region5: #{tpu_custom_call.1} parent=1 // loop_body
      %s20 = ssub.s32 %s15, 1
      %s21 = ssub.s32 %s15, 2
      %s22 = sadd.s32 %s15, 1
      %s24 = sadd.s32 %s23, 1
      %p27 = scmp.eq.s32.totalorder %s15, 4
      %p28 = scmp.ne.s32.totalorder %s23, %s25
      %p29 = scmp.eq.s32.totalorder %s15, 0
      %p30 = por %p28, %p29
      %p31 = scmp.ne.s32.totalorder %s23, %s25
      %p32 = scmp.eq.s32.totalorder %s20, 4
      %p33 = por %p31, %p32
      %p34 = scmp.ne.s32.totalorder %s25, %s26
      %p35 = scmp.eq.s32.totalorder %s20, 0
      %p36 = por %p34, %p35
      %p37 = scmp.ne.s32.totalorder %s25, %s26
      %p38 = scmp.eq.s32.totalorder %s21, 4
      %p39 = por %p37, %p38
      %p41 = scmp.ne.s32.totalorder %s26, %s40
      %p42 = scmp.eq.s32.totalorder %s21, 0
      %p43 = por %p41, %p42
      %s44 = ssub.s32 %s15, %s22
      %p45 = scmp.eq.s32.totalorder %s44, 0
      %s47 = sadd.s32 %s46, 1
      %s48 = scalar_select %p45, %s46, %s47
      %p51 = pneg %p45
      %p52 = scmp.eq.s32.totalorder %s15, 4
      %p53 = por %p51, %p52
      %p54 = scmp.ne.s32.totalorder %s46, %s49
      %p55 = scmp.eq.s32.totalorder %s15, 0
      %p56 = por %p54, %p55
      %p57 = scmp.ne.s32.totalorder %s46, %s49
      %p58 = scmp.eq.s32.totalorder %s20, 4
      %p59 = por %p57, %p58
      %p60 = scmp.ne.s32.totalorder %s49, %s50
      %p61 = scmp.eq.s32.totalorder %s20, 0
      %p62 = por %p60, %p61
      %p63 = scmp.ne.s32.totalorder %s49, %s50
      %p64 = scmp.eq.s32.totalorder %s21, 4
      %p65 = por %p63, %p64
      %p67 = scmp.ne.s32.totalorder %s50, %s66
      %p68 = scmp.eq.s32.totalorder %s21, 0
      %p69 = por %p67, %p68
      %s70 = ssub.s32 %s15, %s22
      %p71 = scmp.eq.s32.totalorder %s70, 0
      %s73 = sadd.s32 %s72, 1
      %s74 = scalar_select %p71, %s72, %s73
      %p77 = pneg %p71
      %p78 = scmp.eq.s32.totalorder %s15, 4
      %p79 = por %p77, %p78
      %p80 = scmp.ne.s32.totalorder %s72, %s75
      %p81 = scmp.eq.s32.totalorder %s15, 0
      %p82 = por %p80, %p81
      %p83 = scmp.ne.s32.totalorder %s72, %s75
      %p84 = scmp.eq.s32.totalorder %s20, 4
      %p85 = por %p83, %p84
      %p86 = scmp.ne.s32.totalorder %s75, %s76
      %p87 = scmp.eq.s32.totalorder %s20, 0
      %p88 = por %p86, %p87
      %p89 = scmp.ne.s32.totalorder %s75, %s76
      %p90 = scmp.eq.s32.totalorder %s21, 4
      %p91 = por %p89, %p90
      %p93 = scmp.ne.s32.totalorder %s76, %s92
      %p94 = scmp.eq.s32.totalorder %s21, 0
      %p95 = por %p93, %p94
      %p96 = scmp.le.s32.totalorder 1, %s15
      %p97 = scmp.lt.s32.totalorder %s15, 6
      %p98 = pnand %p96, %p97
      %p99 = pneg %p98
      // Predicated region
      $region9: #{tpu_custom_call.1} parent=5 // pred_check
        _
      $region10: #{tpu_custom_call.1} parent=5 // pred_check_branch
        %101 = sbr.rel (%p98) target = $region12
      $region11: #{tpu_custom_call.1} parent=5 // pred_region
        %s102 = ssub.s32 %s15, 1
        // Predicated region
        $region13: #{tpu_custom_call.1} parent=11 // pred_check
          %p103 = pneg %p36
        $region14: #{tpu_custom_call.1} parent=11 // pred_check_branch
          %105 = sbr.rel (%p103) target = $region16
        $region15: #{tpu_custom_call.1} parent=11 // pred_region
          %s107 = ssub.s32 128, 128
          %108 = vsyncadd [#allocation5], %s107
          %111 = dma.hbm_to_smem %s0, 128, [#allocation2], [#allocation5]
        $region16: #{tpu_custom_call.1} parent=11 // pred_fallthru
          _
      $region12: #{tpu_custom_call.1} parent=5 // pred_fallthru
        _
      %p112 = scmp.lt.s32.totalorder %s15, 5
      // Predicated region
      $region17: #{tpu_custom_call.1} parent=5 // pred_check
        %p113 = pneg %p112
      $region18: #{tpu_custom_call.1} parent=5 // pred_check_branch
        %115 = sbr.rel (%p113) target = $region20
      $region19: #{tpu_custom_call.1} parent=5 // pred_region
        // Predicated region
        $region21: #{tpu_custom_call.1} parent=19 // pred_check
          %p116 = pneg %p56
        $region22: #{tpu_custom_call.1} parent=19 // pred_check_branch
          %118 = sbr.rel (%p116) target = $region24
        $region23: #{tpu_custom_call.1} parent=19 // pred_region
          %s119 = sand.u32 %s46, 1
          %s120 = scalar_lea.sflag [#allocation3], %s119
          %s121 = sand.u32 %s46, 1
          %s122 = smul.addr %s121, 32
          %s123 = scalar_lea.vmem [#allocation6], %s122
          %s125 = ssub.s32 512, 512
          %126 = vsyncadd %s120, %s125
          %s127 = smul.addr %s15, 128
          %s128 = scalar_lea.hbm %s1, %s127
          %s129 = sshll.u32 %s123, 4
          %s130 = int_to_ptr.vmem [resolvable:$true] %s129
          %135 = dma.hbm_to_vmem [thread:$0]  %s128, 512, %s130, %s120, 640, 128, 8
        $region24: #{tpu_custom_call.1} parent=19 // pred_fallthru
          _
      $region20: #{tpu_custom_call.1} parent=5 // pred_fallthru
        _
      %p136 = scmp.le.s32.totalorder 1, %s15
      %p137 = scmp.lt.s32.totalorder %s15, 6
      %p138 = pnand %p136, %p137
      %p139 = pneg %p138
      // Predicated region
      $region25: #{tpu_custom_call.1} parent=5 // pred_check
        _
      $region26: #{tpu_custom_call.1} parent=5 // pred_check_branch
        %141 = sbr.rel (%p138) target = $region28
      $region27: #{tpu_custom_call.1} parent=5 // pred_region
        %s142 = ssub.s32 %s15, 1
        // Predicated region
        $region29: #{tpu_custom_call.1} parent=27 // pred_check
          %p143 = pneg %p36
        $region30: #{tpu_custom_call.1} parent=27 // pred_check_branch
          %145 = sbr.rel (%p143) target = $region32
        $region31: #{tpu_custom_call.1} parent=27 // pred_region
          %146 = dma.done [#allocation5], 128
        $region32: #{tpu_custom_call.1} parent=27 // pred_fallthru
          _
        %s147 = sand.u32 %s49, 1
        %s148 = scalar_lea.sflag [#allocation3], %s147
        %s149 = sand.u32 %s49, 1
        %s150 = smul.addr %s149, 32
        %s151 = scalar_lea.vmem [#allocation6], %s150
        // Predicated region
        $region33: #{tpu_custom_call.1} parent=27 // pred_check
          %p152 = pneg %p62
        $region34: #{tpu_custom_call.1} parent=27 // pred_check_branch
          %154 = sbr.rel (%p152) target = $region36
        $region35: #{tpu_custom_call.1} parent=27 // pred_region
          %155 = dma.done %s148, 512
        $region36: #{tpu_custom_call.1} parent=27 // pred_fallthru
          _
        %156 = sfence
        %p157 = pneg %p36
        %p158 = pneg %p33
        %s159 = sand.u32 %s49, 1
        %s160 = scalar_lea.sflag [#allocation3], %s159
        %s161 = sand.u32 %s49, 1
        %s162 = smul.addr %s161, 32
        %s163 = scalar_lea.vmem [#allocation6], %s162
        %p164 = pneg %p62
        %p165 = pneg %p59
        %p166 = pneg %p88
        %p167 = pneg %p85
        %s168 = sand.u32 %s75, 1
        %s169 = scalar_lea.sflag [#allocation4], %s168
        %s170 = sand.u32 %s75, 1
        %s171 = smul.addr %s170, 24
        %s172 = scalar_lea.vmem [#allocation7], %s171
        %v173 = vld [vmem:[%s151] sm:$0xff]
        %s174 = scalar_lea.vmem %s151, 8 [#allocation6]
        %v175 = vld [vmem:[%s174] sm:$0xff]
        %s176 = scalar_lea.vmem %s151, 16 [#allocation6]
        %v177 = vld [vmem:[%s176] sm:$0xff]
        %s178 = scalar_lea.vmem %s151, 24 [#allocation6]
        %v179 = vld [vmem:[%s178] sm:$0xff]
        %s180 = sld [smem:[#allocation2]]
        %v181 = vstv %s180
        %v182 = vmul.f32 %v173, %v181
        %s183 = sld [smem:[#allocation2 + $0x1]]
        %v184 = vstv %s183
        %v185 = vmul.f32 %v175, %v184
        %v186 = vadd.f32 %v182, %v185
        %s187 = sld [smem:[#allocation2 + $0x2]]
        %v188 = vstv %s187
        %v189 = vmul.f32 %v177, %v188
        %v190 = vadd.f32 %v186, %v189
        %s191 = sld [smem:[#allocation2 + $0x3]]
        %v192 = vstv %s191
        %v193 = vmul.f32 %v179, %v192
        %v194 = vadd.f32 %v190, %v193
        %s195 = sld [smem:[#allocation2 + $0x4]]
        %v196 = vstv %s195
        %v197 = vadd.f32 %v194, %v196
        %v198 = vmax.f32 %v197, 0.0
        %s199 = sld [smem:[#allocation2 + $0x80]]
        %v200 = vstv %s199
        %v201 = vmul.f32 %v173, %v200
        %s202 = sld [smem:[#allocation2 + $0x81]]
        %v203 = vstv %s202
        %v204 = vmul.f32 %v175, %v203
        %v205 = vadd.f32 %v201, %v204
        %s206 = sld [smem:[#allocation2 + $0x82]]
        %v207 = vstv %s206
        %v208 = vmul.f32 %v177, %v207
        %v209 = vadd.f32 %v205, %v208
        %s210 = sld [smem:[#allocation2 + $0x83]]
        %v211 = vstv %s210
        %v212 = vmul.f32 %v179, %v211
        %v213 = vadd.f32 %v209, %v212
        %s214 = sld [smem:[#allocation2 + $0x84]]
        %v215 = vstv %s214
        %v216 = vadd.f32 %v213, %v215
        %v217 = vmax.f32 %v216, 0.0
        %s218 = sld [smem:[#allocation2 + $0x100]]
        %v219 = vstv %s218
        %v220 = vmul.f32 %v173, %v219
        %s221 = sld [smem:[#allocation2 + $0x101]]
        %v222 = vstv %s221
        %v223 = vmul.f32 %v175, %v222
        %v224 = vadd.f32 %v220, %v223
        %s225 = sld [smem:[#allocation2 + $0x102]]
        %v226 = vstv %s225
        %v227 = vmul.f32 %v177, %v226
        %v228 = vadd.f32 %v224, %v227
        %s229 = sld [smem:[#allocation2 + $0x103]]
        %v230 = vstv %s229
        %v231 = vmul.f32 %v179, %v230
        %v232 = vadd.f32 %v228, %v231
        %s233 = sld [smem:[#allocation2 + $0x104]]
        %v234 = vstv %s233
        %v235 = vadd.f32 %v232, %v234
        %v236 = vmax.f32 %v235, 0.0
        %s237 = sld [smem:[#allocation2 + $0x180]]
        %v238 = vstv %s237
        %v239 = vmul.f32 %v173, %v238
        %s240 = sld [smem:[#allocation2 + $0x181]]
        %v241 = vstv %s240
        %v242 = vmul.f32 %v175, %v241
        %v243 = vadd.f32 %v239, %v242
        %s244 = sld [smem:[#allocation2 + $0x182]]
        %v245 = vstv %s244
        %v246 = vmul.f32 %v177, %v245
        %v247 = vadd.f32 %v243, %v246
        %s248 = sld [smem:[#allocation2 + $0x183]]
        %v249 = vstv %s248
        %v250 = vmul.f32 %v179, %v249
        %v251 = vadd.f32 %v247, %v250
        %s252 = sld [smem:[#allocation2 + $0x184]]
        %v253 = vstv %s252
        %v254 = vadd.f32 %v251, %v253
        %v255 = vmax.f32 %v254, 0.0
        %s256 = sld [smem:[#allocation2 + $0x200]]
        %v257 = vstv %s256
        %v258 = vmul.f32 %v173, %v257
        %s259 = sld [smem:[#allocation2 + $0x201]]
        %v260 = vstv %s259
        %v261 = vmul.f32 %v175, %v260
        %v262 = vadd.f32 %v258, %v261
        %s263 = sld [smem:[#allocation2 + $0x202]]
        %v264 = vstv %s263
        %v265 = vmul.f32 %v177, %v264
        %v266 = vadd.f32 %v262, %v265
        %s267 = sld [smem:[#allocation2 + $0x203]]
        %v268 = vstv %s267
        %v269 = vmul.f32 %v179, %v268
        %v270 = vadd.f32 %v266, %v269
        %s271 = sld [smem:[#allocation2 + $0x204]]
        %v272 = vstv %s271
        %v273 = vadd.f32 %v270, %v272
        %v274 = vmax.f32 %v273, 0.0
        %s275 = sld [smem:[#allocation2 + $0x280]]
        %v276 = vstv %s275
        %v277 = vmul.f32 %v173, %v276
        %s278 = sld [smem:[#allocation2 + $0x281]]
        %v279 = vstv %s278
        %v280 = vmul.f32 %v175, %v279
        %v281 = vadd.f32 %v277, %v280
        %s282 = sld [smem:[#allocation2 + $0x282]]
        %v283 = vstv %s282
        %v284 = vmul.f32 %v177, %v283
        %v285 = vadd.f32 %v281, %v284
        %s286 = sld [smem:[#allocation2 + $0x283]]
        %v287 = vstv %s286
        %v288 = vmul.f32 %v179, %v287
        %v289 = vadd.f32 %v285, %v288
        %s290 = sld [smem:[#allocation2 + $0x284]]
        %v291 = vstv %s290
        %v292 = vadd.f32 %v289, %v291
        %v293 = vmax.f32 %v292, 0.0
        %s294 = sld [smem:[#allocation2 + $0x300]]
        %v295 = vstv %s294
        %v296 = vmul.f32 %v173, %v295
        %s297 = sld [smem:[#allocation2 + $0x301]]
        %v298 = vstv %s297
        %v299 = vmul.f32 %v175, %v298
        %v300 = vadd.f32 %v296, %v299
        %s301 = sld [smem:[#allocation2 + $0x302]]
        %v302 = vstv %s301
        %v303 = vmul.f32 %v177, %v302
        %v304 = vadd.f32 %v300, %v303
        %s305 = sld [smem:[#allocation2 + $0x303]]
        %v306 = vstv %s305
        %v307 = vmul.f32 %v179, %v306
        %v308 = vadd.f32 %v304, %v307
        %s309 = sld [smem:[#allocation2 + $0x304]]
        %v310 = vstv %s309
        %v311 = vadd.f32 %v308, %v310
        %v312 = vmax.f32 %v311, 0.0
        %s313 = sld [smem:[#allocation2 + $0x380]]
        %v314 = vstv %s313
        %v315 = vmul.f32 %v173, %v314
        %s316 = sld [smem:[#allocation2 + $0x381]]
        %v317 = vstv %s316
        %v318 = vmul.f32 %v175, %v317
        %v319 = vadd.f32 %v315, %v318
        %s320 = sld [smem:[#allocation2 + $0x382]]
        %v321 = vstv %s320
        %v322 = vmul.f32 %v177, %v321
        %v323 = vadd.f32 %v319, %v322
        %s324 = sld [smem:[#allocation2 + $0x383]]
        %v325 = vstv %s324
        %v326 = vmul.f32 %v179, %v325
        %v327 = vadd.f32 %v323, %v326
        %s328 = sld [smem:[#allocation2 + $0x384]]
        %v329 = vstv %s328
        %v330 = vadd.f32 %v327, %v329
        %v331 = vmax.f32 %v330, 0.0
        %s332 = sld [smem:[#allocation2 + $0x8]]
        %v333 = vstv %s332
        %v334 = vmul.f32 %v198, %v333
        %s335 = sld [smem:[#allocation2 + $0x9]]
        %v336 = vstv %s335
        %v337 = vmul.f32 %v217, %v336
        %v338 = vadd.f32 %v334, %v337
        %s339 = sld [smem:[#allocation2 + $0xa]]
        %v340 = vstv %s339
        %v341 = vmul.f32 %v236, %v340
        %v342 = vadd.f32 %v338, %v341
        %s343 = sld [smem:[#allocation2 + $0xb]]
        %v344 = vstv %s343
        %v345 = vmul.f32 %v255, %v344
        %v346 = vadd.f32 %v342, %v345
        %s347 = sld [smem:[#allocation2 + $0xc]]
        %v348 = vstv %s347
        %v349 = vmul.f32 %v274, %v348
        %v350 = vadd.f32 %v346, %v349
        %s351 = sld [smem:[#allocation2 + $0xd]]
        %v352 = vstv %s351
        %v353 = vmul.f32 %v293, %v352
        %v354 = vadd.f32 %v350, %v353
        %s355 = sld [smem:[#allocation2 + $0xe]]
        %v356 = vstv %s355
        %v357 = vmul.f32 %v312, %v356
        %v358 = vadd.f32 %v354, %v357
        %s359 = sld [smem:[#allocation2 + $0xf]]
        %v360 = vstv %s359
        %v361 = vmul.f32 %v331, %v360
        %v362 = vadd.f32 %v358, %v361
        %s363 = sld [smem:[#allocation2 + $0x10]]
        %v364 = vstv %s363
        %v365 = vadd.f32 %v362, %v364
        %v366 = vmax.f32 %v365, 0.0
        %s367 = sld [smem:[#allocation2 + $0x88]]
        %v368 = vstv %s367
        %v369 = vmul.f32 %v198, %v368
        %s370 = sld [smem:[#allocation2 + $0x89]]
        %v371 = vstv %s370
        %v372 = vmul.f32 %v217, %v371
        %v373 = vadd.f32 %v369, %v372
        %s374 = sld [smem:[#allocation2 + $0x8a]]
        %v375 = vstv %s374
        %v376 = vmul.f32 %v236, %v375
        %v377 = vadd.f32 %v373, %v376
        %s378 = sld [smem:[#allocation2 + $0x8b]]
        %v379 = vstv %s378
        %v380 = vmul.f32 %v255, %v379
        %v381 = vadd.f32 %v377, %v380
        %s382 = sld [smem:[#allocation2 + $0x8c]]
        %v383 = vstv %s382
        %v384 = vmul.f32 %v274, %v383
        %v385 = vadd.f32 %v381, %v384
        %s386 = sld [smem:[#allocation2 + $0x8d]]
        %v387 = vstv %s386
        %v388 = vmul.f32 %v293, %v387
        %v389 = vadd.f32 %v385, %v388
        %s390 = sld [smem:[#allocation2 + $0x8e]]
        %v391 = vstv %s390
        %v392 = vmul.f32 %v312, %v391
        %v393 = vadd.f32 %v389, %v392
        %s394 = sld [smem:[#allocation2 + $0x8f]]
        %v395 = vstv %s394
        %v396 = vmul.f32 %v331, %v395
        %v397 = vadd.f32 %v393, %v396
        %s398 = sld [smem:[#allocation2 + $0x90]]
        %v399 = vstv %s398
        %v400 = vadd.f32 %v397, %v399
        %v401 = vmax.f32 %v400, 0.0
        %s402 = sld [smem:[#allocation2 + $0x108]]
        %v403 = vstv %s402
        %v404 = vmul.f32 %v198, %v403
        %s405 = sld [smem:[#allocation2 + $0x109]]
        %v406 = vstv %s405
        %v407 = vmul.f32 %v217, %v406
        %v408 = vadd.f32 %v404, %v407
        %s409 = sld [smem:[#allocation2 + $0x10a]]
        %v410 = vstv %s409
        %v411 = vmul.f32 %v236, %v410
        %v412 = vadd.f32 %v408, %v411
        %s413 = sld [smem:[#allocation2 + $0x10b]]
        %v414 = vstv %s413
        %v415 = vmul.f32 %v255, %v414
        %v416 = vadd.f32 %v412, %v415
        %s417 = sld [smem:[#allocation2 + $0x10c]]
        %v418 = vstv %s417
        %v419 = vmul.f32 %v274, %v418
        %v420 = vadd.f32 %v416, %v419
        %s421 = sld [smem:[#allocation2 + $0x10d]]
        %v422 = vstv %s421
        %v423 = vmul.f32 %v293, %v422
        %v424 = vadd.f32 %v420, %v423
        %s425 = sld [smem:[#allocation2 + $0x10e]]
        %v426 = vstv %s425
        %v427 = vmul.f32 %v312, %v426
        %v428 = vadd.f32 %v424, %v427
        %s429 = sld [smem:[#allocation2 + $0x10f]]
        %v430 = vstv %s429
        %v431 = vmul.f32 %v331, %v430
        %v432 = vadd.f32 %v428, %v431
        %s433 = sld [smem:[#allocation2 + $0x110]]
        %v434 = vstv %s433
        %v435 = vadd.f32 %v432, %v434
        %v436 = vmax.f32 %v435, 0.0
        %s437 = sld [smem:[#allocation2 + $0x188]]
        %v438 = vstv %s437
        %v439 = vmul.f32 %v198, %v438
        %s440 = sld [smem:[#allocation2 + $0x189]]
        %v441 = vstv %s440
        %v442 = vmul.f32 %v217, %v441
        %v443 = vadd.f32 %v439, %v442
        %s444 = sld [smem:[#allocation2 + $0x18a]]
        %v445 = vstv %s444
        %v446 = vmul.f32 %v236, %v445
        %v447 = vadd.f32 %v443, %v446
        %s448 = sld [smem:[#allocation2 + $0x18b]]
        %v449 = vstv %s448
        %v450 = vmul.f32 %v255, %v449
        %v451 = vadd.f32 %v447, %v450
        %s452 = sld [smem:[#allocation2 + $0x18c]]
        %v453 = vstv %s452
        %v454 = vmul.f32 %v274, %v453
        %v455 = vadd.f32 %v451, %v454
        %s456 = sld [smem:[#allocation2 + $0x18d]]
        %v457 = vstv %s456
        %v458 = vmul.f32 %v293, %v457
        %v459 = vadd.f32 %v455, %v458
        %s460 = sld [smem:[#allocation2 + $0x18e]]
        %v461 = vstv %s460
        %v462 = vmul.f32 %v312, %v461
        %v463 = vadd.f32 %v459, %v462
        %s464 = sld [smem:[#allocation2 + $0x18f]]
        %v465 = vstv %s464
        %v466 = vmul.f32 %v331, %v465
        %v467 = vadd.f32 %v463, %v466
        %s468 = sld [smem:[#allocation2 + $0x190]]
        %v469 = vstv %s468
        %v470 = vadd.f32 %v467, %v469
        %v471 = vmax.f32 %v470, 0.0
        %s472 = sld [smem:[#allocation2 + $0x18]]
        %v473 = vstv %s472
        %v474 = vmul.f32 %v366, %v473
        %s475 = sld [smem:[#allocation2 + $0x19]]
        %v476 = vstv %s475
        %v477 = vmul.f32 %v401, %v476
        %v478 = vadd.f32 %v474, %v477
        %s479 = sld [smem:[#allocation2 + $0x1a]]
        %v480 = vstv %s479
        %v481 = vmul.f32 %v436, %v480
        %v482 = vadd.f32 %v478, %v481
        %s483 = sld [smem:[#allocation2 + $0x1b]]
        %v484 = vstv %s483
        %v485 = vmul.f32 %v471, %v484
        %v486 = vadd.f32 %v482, %v485
        %s487 = sld [smem:[#allocation2 + $0x1c]]
        %v488 = vstv %s487
        %v489 = vadd.f32 %v486, %v488
        %s490 = sld [smem:[#allocation2 + $0x98]]
        %v491 = vstv %s490
        %v492 = vmul.f32 %v366, %v491
        %s493 = sld [smem:[#allocation2 + $0x99]]
        %v494 = vstv %s493
        %v495 = vmul.f32 %v401, %v494
        %v496 = vadd.f32 %v492, %v495
        %s497 = sld [smem:[#allocation2 + $0x9a]]
        %v498 = vstv %s497
        %v499 = vmul.f32 %v436, %v498
        %v500 = vadd.f32 %v496, %v499
        %s501 = sld [smem:[#allocation2 + $0x9b]]
        %v502 = vstv %s501
        %v503 = vmul.f32 %v471, %v502
        %v504 = vadd.f32 %v500, %v503
        %s505 = sld [smem:[#allocation2 + $0x9c]]
        %v506 = vstv %s505
        %v507 = vadd.f32 %v504, %v506
        %s508 = sld [smem:[#allocation2 + $0x118]]
        %v509 = vstv %s508
        %v510 = vmul.f32 %v366, %v509
        %s511 = sld [smem:[#allocation2 + $0x119]]
        %v512 = vstv %s511
        %v513 = vmul.f32 %v401, %v512
        %v514 = vadd.f32 %v510, %v513
        %s515 = sld [smem:[#allocation2 + $0x11a]]
        %v516 = vstv %s515
        %v517 = vmul.f32 %v436, %v516
        %v518 = vadd.f32 %v514, %v517
        %s519 = sld [smem:[#allocation2 + $0x11b]]
        %v520 = vstv %s519
        %v521 = vmul.f32 %v471, %v520
        %v522 = vadd.f32 %v518, %v521
        %s523 = sld [smem:[#allocation2 + $0x11c]]
        %v524 = vstv %s523
        %v525 = vadd.f32 %v522, %v524
        %v526 = vmax.f32 %v489, %v507
        %v527 = vmax.f32 %v526, %v525
        %v528 = vsub.f32 %v489, %v527
        %v529 = vmul.f32 %v528, 1.442695
        %v530 = vpow.pop %v529
        %v531 = vsub.f32 %v507, %v527
        %v532 = vmul.f32 %v531, 1.442695
        %v533 = vpow.pop %v532
        %v534 = vsub.f32 %v525, %v527
        %v535 = vmul.f32 %v534, 1.442695
        %v536 = vpow.pop %v535
        %v537 = vadd.f32 %v530, %v533
        %v538 = vadd.f32 %v537, %v536
        %v539 = vrcp.pop %v538
        %v540 = vmul.f32 %v538, %v539
        %v541 = vsub.f32 2.0, %v540
        %v542 = vmul.f32 %v539, %v541
        %v543 = vmul.f32 %v530, %v542
        %544 = vst [vmem:[%s172] sm:$0xff] %v543
        %v545 = vmul.f32 %v533, %v542
        %s546 = scalar_lea.vmem %s172, 8 [#allocation7]
        %547 = vst [vmem:[%s546] sm:$0xff] %v545
        %v548 = vmul.f32 %v536, %v542
        %s549 = scalar_lea.vmem %s172, 16 [#allocation7]
        %550 = vst [vmem:[%s549] sm:$0xff] %v548
        %s551 = sand.u32 %s75, 1
        %s552 = scalar_lea.sflag [#allocation4], %s551
        %s553 = sand.u32 %s75, 1
        %s554 = smul.addr %s553, 24
        %s555 = scalar_lea.vmem [#allocation7], %s554
        // Predicated region
        $region37: #{tpu_custom_call.1} parent=27 // pred_check
          %p556 = pneg %p85
        $region38: #{tpu_custom_call.1} parent=27 // pred_check_branch
          %558 = sbr.rel (%p556) target = $region40
        $region39: #{tpu_custom_call.1} parent=27 // pred_region
          %s560 = ssub.s32 384, 384
          %561 = vsyncadd %s552, %s560
          %s562 = smul.addr %s20, 128
          %s563 = scalar_lea.hbm %s2, %s562
          %s564 = sshll.u32 %s555, 4
          %s565 = int_to_ptr.vmem [resolvable:$true] %s564
          %570 = dma.vmem_to_hbm [thread:$0]  %s565, 384, %s563, %s552, 128, 640, 8
        $region40: #{tpu_custom_call.1} parent=27 // pred_fallthru
          _
      $region28: #{tpu_custom_call.1} parent=5 // pred_fallthru
        _
      %p571 = scmp.le.s32.totalorder 2, %s15
      // Predicated region
      $region41: #{tpu_custom_call.1} parent=5 // pred_check
        %p572 = pneg %p571
      $region42: #{tpu_custom_call.1} parent=5 // pred_check_branch
        %574 = sbr.rel (%p572) target = $region44
      $region43: #{tpu_custom_call.1} parent=5 // pred_region
        %s575 = ssub.s32 %s15, 2
        // Predicated region
        $region45: #{tpu_custom_call.1} parent=43 // pred_check
          %p576 = pneg %p91
        $region46: #{tpu_custom_call.1} parent=43 // pred_check_branch
          %578 = sbr.rel (%p576) target = $region48
        $region47: #{tpu_custom_call.1} parent=43 // pred_region
          %s579 = sand.u32 %s76, 1
          %s580 = scalar_lea.sflag [#allocation4], %s579
          %s581 = sand.u32 %s76, 1
          %s582 = smul.addr %s581, 24
          %s583 = scalar_lea.vmem [#allocation7], %s582
          %584 = dma.done %s580, 384
        $region48: #{tpu_custom_call.1} parent=43 // pred_fallthru
          _
      $region44: #{tpu_custom_call.1} parent=5 // pred_fallthru
        _
    $region6: #{tpu_custom_call.1} parent=1 // loop_footer
      %s19 = sadd.s32 1, %s15
    $region7: #{tpu_custom_call.1} parent=1 // loop_footer_branch
      %14 = sbr.rel target = $region3
    $region8: #{tpu_custom_call.1} parent=1 // loop_exit
      _
    %585 = vsyncpa [#allocation3], 1
    %s586 = scalar_lea.sflag [#allocation3], 1
    %587 = vsyncpa %s586, 1
    %588 = vsyncpa [#allocation4], 1
    %s589 = scalar_lea.sflag [#allocation4], 1
    %590 = vsyncpa %s589, 1
    %591 = vsyncpa [#allocation5], 1
    %s592 = scalar_lea.sflag [#allocation5], 1
    %593 = vsyncpa %s592, 1

</llo_original>
